<compile_context>
chip_gen: v6e
topology: v6e:2x2x1
jax: 0.10.0
libtpu: 0.0.40
codegen_flags: <defaults>
</compile_context>

<pallas_src>
import numpy as np
import jax
import jax.numpy as jnp
from jax.experimental import pallas as pl
from jax.experimental.pallas import tpu as pltpu

_LANES = 128


def _chip_budget():
    """Returns (max_block_rows, scoped_vmem_limit_bytes) per chip generation."""
    try:
        info = pltpu.get_tpu_info()
        vmem_phys = int(getattr(info, "vmem_capacity_bytes", 0)
                        or getattr(info, "vmem_size_bytes", 0)
                        or (64 << 20))
    except Exception:
        vmem_phys = 64 << 20                       # conservative (v7x-sized)
    if vmem_phys >= (100 << 20):                   # v5e / v6e: 128 MiB VMEM
        return 2048, 96 << 20
    return 1024, 48 << 20                          # v7x: 64 MiB VMEM


def _make_quasi_geq_kernel(ex, ey, w, out_dtype):
    """Kernel with the D2Q9 constants ex/ey/w baked in as Python literals."""
    Q = len(ex)

    def kernel(rho_ref, ux_ref, uy_ref, E_ref, T_ref,
               pxx_eq_ref, pxy_eq_ref, pyy_eq_ref,
               pxx_ref, pxy_ref, pyy_ref,
               qx_eq_ref, qy_eq_ref,
               rxx_eq_ref, rxy_eq_ref, ryy_eq_ref,
               out_ref):
        f32 = jnp.float32
        rho = rho_ref[...].astype(f32)
        ux = ux_ref[...].astype(f32)
        uy = uy_ref[...].astype(f32)
        E = E_ref[...].astype(f32)
        # Clamp T before the reciprocal: a ragged last block's OOB lanes hold
        # unspecified VMEM (their output stores are dropped anyway).
        T = jnp.maximum(T_ref[...].astype(f32), 1e-20)

        # One exact reciprocal per tile instead of divides per element per q.
        inv_T = pl.reciprocal(T)
        inv_2T2 = 0.5 * inv_T * inv_T

        diff_pxx = pxx_ref[...].astype(f32) - pxx_eq_ref[...].astype(f32)
        diff_pxy = pxy_ref[...].astype(f32) - pxy_eq_ref[...].astype(f32)
        diff_pyy = pyy_ref[...].astype(f32) - pyy_eq_ref[...].astype(f32)

        two_rho_E = 2.0 * rho * E
        two_rho_E_T = two_rho_E * T

        # q-independent heat-flux brackets (shared across all 9 directions).
        ax = qx_eq_ref[...].astype(f32) + 2.0 * ux * diff_pxx + 2.0 * uy * diff_pxy
        ay = qy_eq_ref[...].astype(f32) + 2.0 * ux * diff_pxy + 2.0 * uy * diff_pyy

        rxx_c = rxx_eq_ref[...].astype(f32) - two_rho_E_T
        ryy_c = ryy_eq_ref[...].astype(f32) - two_rho_E_T
        rxy = rxy_eq_ref[...].astype(f32)

        # Unrolled over the 9 lattice directions; ex/ey in {0, +-1} so many
        # terms fold to nothing at trace time.
        for q in range(Q):
            exq, eyq, wq = ex[q], ey[q], w[q]

            term3 = rxx_c * (exq * exq - T) + ryy_c * (eyq * eyq - T)
            if exq != 0.0 and eyq != 0.0:
                term3 = term3 + rxy * (exq * eyq)

            val = two_rho_E + term3 * inv_2T2

            t2 = None
            if exq != 0.0:
                t2 = ax if exq == 1.0 else ax * exq
            if eyq != 0.0:
                ay_t = ay if eyq == 1.0 else ay * eyq
                t2 = ay_t if t2 is None else t2 + ay_t
            if t2 is not None:
                val = val + t2 * inv_T

            out_ref[q, :, :] = (wq * val).astype(out_dtype)

    return kernel


def get_quasi_geq(w, rho, ux, uy, E, T, Pxx_eq, Pxy_eq, Pyy_eq,
                  Pxx, Pxy, Pyy, qx_eq, qy_eq, Rxx_eq, Rxy_eq, Ryy_eq,
                  ex, ey):
    """Pallas TPU implementation of Get_Quasi_Geq.forward."""
    # D2Q9 lattice constants are compile-time values: bake them as Python
    # floats (the module is always used with concrete ex/ey/w).
    ex_c = tuple(float(v) for v in np.asarray(jax.device_get(ex)).reshape(-1))
    ey_c = tuple(float(v) for v in np.asarray(jax.device_get(ey)).reshape(-1))
    w_c = tuple(float(v) for v in np.asarray(jax.device_get(w)).reshape(-1))
    Q = len(ex_c)
    assert len(ey_c) == Q and len(w_c) == Q

    H, Wd = rho.shape
    N = H * Wd
    out_dtype = rho.dtype

    # Lane-dense layout: (rows, 128).  When N % 128 == 0 the reshape is a free
    # view (no extra HBM traffic).  Otherwise a small pad copy is the fallback.
    rows = -(-N // _LANES)
    n_lane = rows * _LANES
    need_pad = n_lane != N

    def prep(f):
        flat = f.reshape(-1)
        if need_pad:
            # Rare fallback (N % 128 != 0): pads < 128 elements per field.
            flat = jnp.pad(flat, (0, n_lane - N))
        return flat.reshape(rows, _LANES)

    fields = [prep(f) for f in (rho, ux, uy, E, T,
                                Pxx_eq, Pxy_eq, Pyy_eq, Pxx, Pxy, Pyy,
                                qx_eq, qy_eq, Rxx_eq, Rxy_eq, Ryy_eq)]

    # Generation-specific tile size; keep >= 2 grid steps for mid/large
    # problems (megacore sharding on v7x + prefetch/writeback overlap).
    target_rows, vmem_limit = _chip_budget()
    if rows < 16:
        block_rows = rows                       # single block == full dim
    else:
        block_rows = max(8, min(target_rows, (rows // 2) // 8 * 8))
    grid = (pl.cdiv(rows, block_rows),)

    field_spec = pl.BlockSpec((block_rows, _LANES), lambda i: (i, 0))
    out_spec = pl.BlockSpec((Q, block_rows, _LANES), lambda i: (0, i, 0))

    # Advisory cost: this call is HBM-bound (~25 fields of traffic, ~105 flops/elem).
    in_bytes = sum(int(np.dtype(f.dtype).itemsize) for f in fields)
    out_bytes = Q * int(np.dtype(out_dtype).itemsize)
    cost = pl.CostEstimate(
        flops=105 * n_lane,
        transcendentals=0,
        bytes_accessed=(in_bytes + out_bytes) * n_lane,
    )

    kernel = _make_quasi_geq_kernel(ex_c, ey_c, w_c, out_dtype)

    out = pl.pallas_call(
        kernel,
        out_shape=jax.ShapeDtypeStruct((Q, rows, _LANES), out_dtype),
        grid=grid,
        in_specs=[field_spec] * len(fields),
        out_specs=out_spec,
        compiler_params=pltpu.CompilerParams(
            dimension_semantics=("parallel",),   # spatial tiles are independent
            vmem_limit_bytes=vmem_limit,
        ),
        cost_estimate=cost,
    )(*fields)

    if need_pad:
        return out.reshape(Q, n_lane)[:, :N].reshape(Q, H, Wd)
    return out.reshape(Q, H, Wd)                # free view when N % 128 == 0


def _reference_quasi_geq(w, rho, ux, uy, E, T, Pxx_eq, Pxy_eq, Pyy_eq,
                         Pxx, Pxy, Pyy, qx_eq, qy_eq, Rxx_eq, Rxy_eq, Ryy_eq,
                         ex, ey):
    # Plain-JAX replica of the PyTorch forward (for validation only).
    ex = ex.reshape(9, 1, 1)
    ey = ey.reshape(9, 1, 1)
    w = w.reshape(9, 1, 1)
    diff_Pxx = Pxx - Pxx_eq
    diff_Pxy = Pxy - Pxy_eq
    diff_Pyy = Pyy - Pyy_eq
    term1 = 2.0 * rho * E
    term2_x = (qx_eq + 2 * ux * diff_Pxx + 2 * uy * diff_Pxy) * ex
    term2_y = (qy_eq + 2 * ux * diff_Pxy + 2 * uy * diff_Pyy) * ey
    term3 = ((Rxx_eq - 2 * rho * E * T) * (ex ** 2 - T)
             + (Ryy_eq - 2 * rho * E * T) * (ey ** 2 - T)
             + Rxy_eq * (ex * ey)) / (2 * T ** 2)
    return w * (term1 + (term2_x + term2_y) / T + term3)


def _run_case(key, H, Wd, ex, ey, w_lat):
    keys = jax.random.split(key, 16)

    def fld(k, lo=-0.1, hi=0.1):
        return jax.random.uniform(k, (H, Wd), jnp.float32, lo, hi)

    rho = 1.0 + fld(keys[0])
    ux = fld(keys[1])
    uy = fld(keys[2])
    E = 1.0 + fld(keys[3])
    T = 1.0 / 3.0 + fld(keys[4], -0.01, 0.01)   # keep T strictly positive
    Pxx_eq = fld(keys[5]); Pxy_eq = fld(keys[6]); Pyy_eq = fld(keys[7])
    Pxx = fld(keys[8]); Pxy = fld(keys[9]); Pyy = fld(keys[10])
    qx_eq = fld(keys[11]); qy_eq = fld(keys[12])
    Rxx_eq = fld(keys[13]); Rxy_eq = fld(keys[14]); Ryy_eq = fld(keys[15])

    args = (w_lat, rho, ux, uy, E, T, Pxx_eq, Pxy_eq, Pyy_eq,
            Pxx, Pxy, Pyy, qx_eq, qy_eq, Rxx_eq, Rxy_eq, Ryy_eq, ex, ey)

    out = jax.block_until_ready(get_quasi_geq(*args))
    ref = _reference_quasi_geq(*args)
    assert out.shape == (9, H, Wd)
    assert jnp.allclose(out, ref, rtol=1e-5, atol=1e-5), f"mismatch ({H}x{Wd})"


if __name__ == "__main__":
    # D2Q9 lattice constants (standard LBM values).
    ex = jnp.array([0, 1, 0, -1, 0, 1, -1, -1, 1], dtype=jnp.float32)
    ey = jnp.array([0, 0, 1, 0, -1, 1, 1, -1, -1], dtype=jnp.float32)
    w_lat = jnp.array([4 / 9] + [1 / 9] * 4 + [1 / 36] * 4, dtype=jnp.float32)

    key = jax.random.PRNGKey(0)
    k1, k2 = jax.random.split(key)

    # Small case: single block (grid = 1).
    _run_case(k1, 16, 16, ex, ey, w_lat)
    # Mid case: multi-step grid with a ragged last block (rows=40, block=16).
    _run_case(k2, 40, 128, ex, ey, w_lat)

    print("KERNEL_OK")
</pallas_src>

<mosaic_0001>
module attributes {stable_mosaic.version = 11 : i64} {
  func.func @kernel(%arg0: i32, %arg1: memref<2x128xf32, #tpu.memory_space<vmem>>, %arg2: memref<2x128xf32, #tpu.memory_space<vmem>>, %arg3: memref<2x128xf32, #tpu.memory_space<vmem>>, %arg4: memref<2x128xf32, #tpu.memory_space<vmem>>, %arg5: memref<2x128xf32, #tpu.memory_space<vmem>>, %arg6: memref<2x128xf32, #tpu.memory_space<vmem>>, %arg7: memref<2x128xf32, #tpu.memory_space<vmem>>, %arg8: memref<2x128xf32, #tpu.memory_space<vmem>>, %arg9: memref<2x128xf32, #tpu.memory_space<vmem>>, %arg10: memref<2x128xf32, #tpu.memory_space<vmem>>, %arg11: memref<2x128xf32, #tpu.memory_space<vmem>>, %arg12: memref<2x128xf32, #tpu.memory_space<vmem>>, %arg13: memref<2x128xf32, #tpu.memory_space<vmem>>, %arg14: memref<2x128xf32, #tpu.memory_space<vmem>>, %arg15: memref<2x128xf32, #tpu.memory_space<vmem>>, %arg16: memref<2x128xf32, #tpu.memory_space<vmem>>, %arg17: memref<9x2x128xf32, #tpu.memory_space<vmem>>) attributes {dimension_semantics = [#tpu.dimension_semantics<parallel>], iteration_bounds = array<i64: 1>, scalar_prefetch = 0 : i64, scratch_operands = 0 : i64, tpu.core_type = #tpu.core_type<tc>, window_params = [{transform_indices = @transform_0, window_bounds = array<i64: 2, 128>}, {transform_indices = @transform_1, window_bounds = array<i64: 2, 128>}, {transform_indices = @transform_2, window_bounds = array<i64: 2, 128>}, {transform_indices = @transform_3, window_bounds = array<i64: 2, 128>}, {transform_indices = @transform_4, window_bounds = array<i64: 2, 128>}, {transform_indices = @transform_5, window_bounds = array<i64: 2, 128>}, {transform_indices = @transform_6, window_bounds = array<i64: 2, 128>}, {transform_indices = @transform_7, window_bounds = array<i64: 2, 128>}, {transform_indices = @transform_8, window_bounds = array<i64: 2, 128>}, {transform_indices = @transform_9, window_bounds = array<i64: 2, 128>}, {transform_indices = @transform_10, window_bounds = array<i64: 2, 128>}, {transform_indices = @transform_11, window_bounds = array<i64: 2, 128>}, {transform_indices = @transform_12, window_bounds = array<i64: 2, 128>}, {transform_indices = @transform_13, window_bounds = array<i64: 2, 128>}, {transform_indices = @transform_14, window_bounds = array<i64: 2, 128>}, {transform_indices = @transform_15, window_bounds = array<i64: 2, 128>}, {transform_indices = @transform_16, window_bounds = array<i64: 9, 2, 128>}]} {
    %c0 = arith.constant 0 : index
    %c0_0 = arith.constant 0 : index
    %0 = vector.load %arg1[%c0, %c0_0] : memref<2x128xf32, #tpu.memory_space<vmem>>, vector<2x128xf32>
    %c0_1 = arith.constant 0 : index
    %c0_2 = arith.constant 0 : index
    %1 = vector.load %arg2[%c0_1, %c0_2] : memref<2x128xf32, #tpu.memory_space<vmem>>, vector<2x128xf32>
    %c0_3 = arith.constant 0 : index
    %c0_4 = arith.constant 0 : index
    %2 = vector.load %arg3[%c0_3, %c0_4] : memref<2x128xf32, #tpu.memory_space<vmem>>, vector<2x128xf32>
    %c0_5 = arith.constant 0 : index
    %c0_6 = arith.constant 0 : index
    %3 = vector.load %arg4[%c0_5, %c0_6] : memref<2x128xf32, #tpu.memory_space<vmem>>, vector<2x128xf32>
    %c0_7 = arith.constant 0 : index
    %c0_8 = arith.constant 0 : index
    %4 = vector.load %arg5[%c0_7, %c0_8] : memref<2x128xf32, #tpu.memory_space<vmem>>, vector<2x128xf32>
    %cst = arith.constant 9.99999968E-21 : f32
    %5 = vector.broadcast %cst : f32 to vector<2x128xf32>
    %6 = arith.maximumf %4, %5 : vector<2x128xf32>
    %7 = tpu.reciprocal %6 : vector<2x128xf32> -> vector<2x128xf32>
    %cst_9 = arith.constant 5.000000e-01 : f32
    %8 = vector.broadcast %cst_9 : f32 to vector<2x128xf32>
    %9 = arith.mulf %8, %7 : vector<2x128xf32>
    %10 = arith.mulf %9, %7 : vector<2x128xf32>
    %c0_10 = arith.constant 0 : index
    %c0_11 = arith.constant 0 : index
    %11 = vector.load %arg9[%c0_10, %c0_11] : memref<2x128xf32, #tpu.memory_space<vmem>>, vector<2x128xf32>
    %c0_12 = arith.constant 0 : index
    %c0_13 = arith.constant 0 : index
    %12 = vector.load %arg6[%c0_12, %c0_13] : memref<2x128xf32, #tpu.memory_space<vmem>>, vector<2x128xf32>
    %13 = arith.subf %11, %12 : vector<2x128xf32>
    %c0_14 = arith.constant 0 : index
    %c0_15 = arith.constant 0 : index
    %14 = vector.load %arg10[%c0_14, %c0_15] : memref<2x128xf32, #tpu.memory_space<vmem>>, vector<2x128xf32>
    %c0_16 = arith.constant 0 : index
    %c0_17 = arith.constant 0 : index
    %15 = vector.load %arg7[%c0_16, %c0_17] : memref<2x128xf32, #tpu.memory_space<vmem>>, vector<2x128xf32>
    %16 = arith.subf %14, %15 : vector<2x128xf32>
    %c0_18 = arith.constant 0 : index
    %c0_19 = arith.constant 0 : index
    %17 = vector.load %arg11[%c0_18, %c0_19] : memref<2x128xf32, #tpu.memory_space<vmem>>, vector<2x128xf32>
    %c0_20 = arith.constant 0 : index
    %c0_21 = arith.constant 0 : index
    %18 = vector.load %arg8[%c0_20, %c0_21] : memref<2x128xf32, #tpu.memory_space<vmem>>, vector<2x128xf32>
    %19 = arith.subf %17, %18 : vector<2x128xf32>
    %cst_22 = arith.constant 2.000000e+00 : f32
    %20 = vector.broadcast %cst_22 : f32 to vector<2x128xf32>
    %21 = arith.mulf %20, %0 : vector<2x128xf32>
    %22 = arith.mulf %21, %3 : vector<2x128xf32>
    %23 = arith.mulf %22, %6 : vector<2x128xf32>
    %c0_23 = arith.constant 0 : index
    %c0_24 = arith.constant 0 : index
    %24 = vector.load %arg12[%c0_23, %c0_24] : memref<2x128xf32, #tpu.memory_space<vmem>>, vector<2x128xf32>
    %cst_25 = arith.constant 2.000000e+00 : f32
    %25 = vector.broadcast %cst_25 : f32 to vector<2x128xf32>
    %26 = arith.mulf %25, %1 : vector<2x128xf32>
    %27 = arith.mulf %26, %13 : vector<2x128xf32>
    %28 = arith.addf %24, %27 : vector<2x128xf32>
    %cst_26 = arith.constant 2.000000e+00 : f32
    %29 = vector.broadcast %cst_26 : f32 to vector<2x128xf32>
    %30 = arith.mulf %29, %2 : vector<2x128xf32>
    %31 = arith.mulf %30, %16 : vector<2x128xf32>
    %32 = arith.addf %28, %31 : vector<2x128xf32>
    %c0_27 = arith.constant 0 : index
    %c0_28 = arith.constant 0 : index
    %33 = vector.load %arg13[%c0_27, %c0_28] : memref<2x128xf32, #tpu.memory_space<vmem>>, vector<2x128xf32>
    %cst_29 = arith.constant 2.000000e+00 : f32
    %34 = vector.broadcast %cst_29 : f32 to vector<2x128xf32>
    %35 = arith.mulf %34, %1 : vector<2x128xf32>
    %36 = arith.mulf %35, %16 : vector<2x128xf32>
    %37 = arith.addf %33, %36 : vector<2x128xf32>
    %cst_30 = arith.constant 2.000000e+00 : f32
    %38 = vector.broadcast %cst_30 : f32 to vector<2x128xf32>
    %39 = arith.mulf %38, %2 : vector<2x128xf32>
    %40 = arith.mulf %39, %19 : vector<2x128xf32>
    %41 = arith.addf %37, %40 : vector<2x128xf32>
    %c0_31 = arith.constant 0 : index
    %c0_32 = arith.constant 0 : index
    %42 = vector.load %arg14[%c0_31, %c0_32] : memref<2x128xf32, #tpu.memory_space<vmem>>, vector<2x128xf32>
    %43 = arith.subf %42, %23 : vector<2x128xf32>
    %c0_33 = arith.constant 0 : index
    %c0_34 = arith.constant 0 : index
    %44 = vector.load %arg16[%c0_33, %c0_34] : memref<2x128xf32, #tpu.memory_space<vmem>>, vector<2x128xf32>
    %45 = arith.subf %44, %23 : vector<2x128xf32>
    %c0_35 = arith.constant 0 : index
    %c0_36 = arith.constant 0 : index
    %46 = vector.load %arg15[%c0_35, %c0_36] : memref<2x128xf32, #tpu.memory_space<vmem>>, vector<2x128xf32>
    %cst_37 = arith.constant 0.000000e+00 : f32
    %47 = vector.broadcast %cst_37 : f32 to vector<2x128xf32>
    %48 = arith.subf %47, %6 : vector<2x128xf32>
    %49 = arith.mulf %43, %48 : vector<2x128xf32>
    %cst_38 = arith.constant 0.000000e+00 : f32
    %50 = vector.broadcast %cst_38 : f32 to vector<2x128xf32>
    %51 = arith.subf %50, %6 : vector<2x128xf32>
    %52 = arith.mulf %45, %51 : vector<2x128xf32>
    %53 = arith.addf %49, %52 : vector<2x128xf32>
    %54 = arith.mulf %53, %10 : vector<2x128xf32>
    %55 = arith.addf %22, %54 : vector<2x128xf32>
    %cst_39 = arith.constant 0.444444448 : f32
    %56 = vector.broadcast %cst_39 : f32 to vector<2x128xf32>
    %57 = arith.mulf %56, %55 : vector<2x128xf32>
    %c0_40 = arith.constant 0 : index
    %c0_41 = arith.constant 0 : index
    %c0_42 = arith.constant 0 : index
    %58 = vector.load %arg17[%c0_40, %c0_41, %c0_42] : memref<9x2x128xf32, #tpu.memory_space<vmem>>, vector<1x2x128xf32>
    %59 = vector.shape_cast %58 : vector<1x2x128xf32> to vector<2x128xf32>
    %60 = vector.shape_cast %57 : vector<2x128xf32> to vector<1x2x128xf32>
    tpu.vector_store %arg17[%c0_40, %c0_41, %c0_42], %60 {strides = array<i32>} : memref<9x2x128xf32, #tpu.memory_space<vmem>>, vector<1x2x128xf32>,
    %cst_43 = arith.constant 1.000000e+00 : f32
    %61 = vector.broadcast %cst_43 : f32 to vector<2x128xf32>
    %62 = arith.subf %61, %6 : vector<2x128xf32>
    %63 = arith.mulf %43, %62 : vector<2x128xf32>
    %cst_44 = arith.constant 0.000000e+00 : f32
    %64 = vector.broadcast %cst_44 : f32 to vector<2x128xf32>
    %65 = arith.subf %64, %6 : vector<2x128xf32>
    %66 = arith.mulf %45, %65 : vector<2x128xf32>
    %67 = arith.addf %63, %66 : vector<2x128xf32>
    %68 = arith.mulf %67, %10 : vector<2x128xf32>
    %69 = arith.addf %22, %68 : vector<2x128xf32>
    %70 = arith.mulf %32, %7 : vector<2x128xf32>
    %71 = arith.addf %69, %70 : vector<2x128xf32>
    %cst_45 = arith.constant 0.111111112 : f32
    %72 = vector.broadcast %cst_45 : f32 to vector<2x128xf32>
    %73 = arith.mulf %72, %71 : vector<2x128xf32>
    %c1 = arith.constant 1 : index
    %c0_46 = arith.constant 0 : index
    %c0_47 = arith.constant 0 : index
    %74 = vector.load %arg17[%c1, %c0_46, %c0_47] : memref<9x2x128xf32, #tpu.memory_space<vmem>>, vector<1x2x128xf32>
    %75 = vector.shape_cast %74 : vector<1x2x128xf32> to vector<2x128xf32>
    %76 = vector.shape_cast %73 : vector<2x128xf32> to vector<1x2x128xf32>
    tpu.vector_store %arg17[%c1, %c0_46, %c0_47], %76 {strides = array<i32>} : memref<9x2x128xf32, #tpu.memory_space<vmem>>, vector<1x2x128xf32>,
    %cst_48 = arith.constant 0.000000e+00 : f32
    %77 = vector.broadcast %cst_48 : f32 to vector<2x128xf32>
    %78 = arith.subf %77, %6 : vector<2x128xf32>
    %79 = arith.mulf %43, %78 : vector<2x128xf32>
    %cst_49 = arith.constant 1.000000e+00 : f32
    %80 = vector.broadcast %cst_49 : f32 to vector<2x128xf32>
    %81 = arith.subf %80, %6 : vector<2x128xf32>
    %82 = arith.mulf %45, %81 : vector<2x128xf32>
    %83 = arith.addf %79, %82 : vector<2x128xf32>
    %84 = arith.mulf %83, %10 : vector<2x128xf32>
    %85 = arith.addf %22, %84 : vector<2x128xf32>
    %86 = arith.mulf %41, %7 : vector<2x128xf32>
    %87 = arith.addf %85, %86 : vector<2x128xf32>
    %cst_50 = arith.constant 0.111111112 : f32
    %88 = vector.broadcast %cst_50 : f32 to vector<2x128xf32>
    %89 = arith.mulf %88, %87 : vector<2x128xf32>
    %c2 = arith.constant 2 : index
    %c0_51 = arith.constant 0 : index
    %c0_52 = arith.constant 0 : index
    %90 = vector.load %arg17[%c2, %c0_51, %c0_52] : memref<9x2x128xf32, #tpu.memory_space<vmem>>, vector<1x2x128xf32>
    %91 = vector.shape_cast %90 : vector<1x2x128xf32> to vector<2x128xf32>
    %92 = vector.shape_cast %89 : vector<2x128xf32> to vector<1x2x128xf32>
    tpu.vector_store %arg17[%c2, %c0_51, %c0_52], %92 {strides = array<i32>} : memref<9x2x128xf32, #tpu.memory_space<vmem>>, vector<1x2x128xf32>,
    %cst_53 = arith.constant 1.000000e+00 : f32
    %93 = vector.broadcast %cst_53 : f32 to vector<2x128xf32>
    %94 = arith.subf %93, %6 : vector<2x128xf32>
    %95 = arith.mulf %43, %94 : vector<2x128xf32>
    %cst_54 = arith.constant 0.000000e+00 : f32
    %96 = vector.broadcast %cst_54 : f32 to vector<2x128xf32>
    %97 = arith.subf %96, %6 : vector<2x128xf32>
    %98 = arith.mulf %45, %97 : vector<2x128xf32>
    %99 = arith.addf %95, %98 : vector<2x128xf32>
    %100 = arith.mulf %99, %10 : vector<2x128xf32>
    %101 = arith.addf %22, %100 : vector<2x128xf32>
    %cst_55 = arith.constant -1.000000e+00 : f32
    %102 = vector.broadcast %cst_55 : f32 to vector<2x128xf32>
    %103 = arith.mulf %32, %102 : vector<2x128xf32>
    %104 = arith.mulf %103, %7 : vector<2x128xf32>
    %105 = arith.addf %101, %104 : vector<2x128xf32>
    %cst_56 = arith.constant 0.111111112 : f32
    %106 = vector.broadcast %cst_56 : f32 to vector<2x128xf32>
    %107 = arith.mulf %106, %105 : vector<2x128xf32>
    %c3 = arith.constant 3 : index
    %c0_57 = arith.constant 0 : index
    %c0_58 = arith.constant 0 : index
    %108 = vector.load %arg17[%c3, %c0_57, %c0_58] : memref<9x2x128xf32, #tpu.memory_space<vmem>>, vector<1x2x128xf32>
    %109 = vector.shape_cast %108 : vector<1x2x128xf32> to vector<2x128xf32>
    %110 = vector.shape_cast %107 : vector<2x128xf32> to vector<1x2x128xf32>
    tpu.vector_store %arg17[%c3, %c0_57, %c0_58], %110 {strides = array<i32>} : memref<9x2x128xf32, #tpu.memory_space<vmem>>, vector<1x2x128xf32>,
    %cst_59 = arith.constant 0.000000e+00 : f32
    %111 = vector.broadcast %cst_59 : f32 to vector<2x128xf32>
    %112 = arith.subf %111, %6 : vector<2x128xf32>
    %113 = arith.mulf %43, %112 : vector<2x128xf32>
    %cst_60 = arith.constant 1.000000e+00 : f32
    %114 = vector.broadcast %cst_60 : f32 to vector<2x128xf32>
    %115 = arith.subf %114, %6 : vector<2x128xf32>
    %116 = arith.mulf %45, %115 : vector<2x128xf32>
    %117 = arith.addf %113, %116 : vector<2x128xf32>
    %118 = arith.mulf %117, %10 : vector<2x128xf32>
    %119 = arith.addf %22, %118 : vector<2x128xf32>
    %cst_61 = arith.constant -1.000000e+00 : f32
    %120 = vector.broadcast %cst_61 : f32 to vector<2x128xf32>
    %121 = arith.mulf %41, %120 : vector<2x128xf32>
    %122 = arith.mulf %121, %7 : vector<2x128xf32>
    %123 = arith.addf %119, %122 : vector<2x128xf32>
    %cst_62 = arith.constant 0.111111112 : f32
    %124 = vector.broadcast %cst_62 : f32 to vector<2x128xf32>
    %125 = arith.mulf %124, %123 : vector<2x128xf32>
    %c4 = arith.constant 4 : index
    %c0_63 = arith.constant 0 : index
    %c0_64 = arith.constant 0 : index
    %126 = vector.load %arg17[%c4, %c0_63, %c0_64] : memref<9x2x128xf32, #tpu.memory_space<vmem>>, vector<1x2x128xf32>
    %127 = vector.shape_cast %126 : vector<1x2x128xf32> to vector<2x128xf32>
    %128 = vector.shape_cast %125 : vector<2x128xf32> to vector<1x2x128xf32>
    tpu.vector_store %arg17[%c4, %c0_63, %c0_64], %128 {strides = array<i32>} : memref<9x2x128xf32, #tpu.memory_space<vmem>>, vector<1x2x128xf32>,
    %cst_65 = arith.constant 1.000000e+00 : f32
    %129 = vector.broadcast %cst_65 : f32 to vector<2x128xf32>
    %130 = arith.subf %129, %6 : vector<2x128xf32>
    %131 = arith.mulf %43, %130 : vector<2x128xf32>
    %cst_66 = arith.constant 1.000000e+00 : f32
    %132 = vector.broadcast %cst_66 : f32 to vector<2x128xf32>
    %133 = arith.subf %132, %6 : vector<2x128xf32>
    %134 = arith.mulf %45, %133 : vector<2x128xf32>
    %135 = arith.addf %131, %134 : vector<2x128xf32>
    %cst_67 = arith.constant 1.000000e+00 : f32
    %136 = vector.broadcast %cst_67 : f32 to vector<2x128xf32>
    %137 = arith.mulf %46, %136 : vector<2x128xf32>
    %138 = arith.addf %135, %137 : vector<2x128xf32>
    %139 = arith.mulf %138, %10 : vector<2x128xf32>
    %140 = arith.addf %22, %139 : vector<2x128xf32>
    %141 = arith.addf %32, %41 : vector<2x128xf32>
    %142 = arith.mulf %141, %7 : vector<2x128xf32>
    %143 = arith.addf %140, %142 : vector<2x128xf32>
    %cst_68 = arith.constant 0.027777778 : f32
    %144 = vector.broadcast %cst_68 : f32 to vector<2x128xf32>
    %145 = arith.mulf %144, %143 : vector<2x128xf32>
    %c5 = arith.constant 5 : index
    %c0_69 = arith.constant 0 : index
    %c0_70 = arith.constant 0 : index
    %146 = vector.load %arg17[%c5, %c0_69, %c0_70] : memref<9x2x128xf32, #tpu.memory_space<vmem>>, vector<1x2x128xf32>
    %147 = vector.shape_cast %146 : vector<1x2x128xf32> to vector<2x128xf32>
    %148 = vector.shape_cast %145 : vector<2x128xf32> to vector<1x2x128xf32>
    tpu.vector_store %arg17[%c5, %c0_69, %c0_70], %148 {strides = array<i32>} : memref<9x2x128xf32, #tpu.memory_space<vmem>>, vector<1x2x128xf32>,
    %cst_71 = arith.constant 1.000000e+00 : f32
    %149 = vector.broadcast %cst_71 : f32 to vector<2x128xf32>
    %150 = arith.subf %149, %6 : vector<2x128xf32>
    %151 = arith.mulf %43, %150 : vector<2x128xf32>
    %cst_72 = arith.constant 1.000000e+00 : f32
    %152 = vector.broadcast %cst_72 : f32 to vector<2x128xf32>
    %153 = arith.subf %152, %6 : vector<2x128xf32>
    %154 = arith.mulf %45, %153 : vector<2x128xf32>
    %155 = arith.addf %151, %154 : vector<2x128xf32>
    %cst_73 = arith.constant -1.000000e+00 : f32
    %156 = vector.broadcast %cst_73 : f32 to vector<2x128xf32>
    %157 = arith.mulf %46, %156 : vector<2x128xf32>
    %158 = arith.addf %155, %157 : vector<2x128xf32>
    %159 = arith.mulf %158, %10 : vector<2x128xf32>
    %160 = arith.addf %22, %159 : vector<2x128xf32>
    %cst_74 = arith.constant -1.000000e+00 : f32
    %161 = vector.broadcast %cst_74 : f32 to vector<2x128xf32>
    %162 = arith.mulf %32, %161 : vector<2x128xf32>
    %163 = arith.addf %162, %41 : vector<2x128xf32>
    %164 = arith.mulf %163, %7 : vector<2x128xf32>
    %165 = arith.addf %160, %164 : vector<2x128xf32>
    %cst_75 = arith.constant 0.027777778 : f32
    %166 = vector.broadcast %cst_75 : f32 to vector<2x128xf32>
    %167 = arith.mulf %166, %165 : vector<2x128xf32>
    %c6 = arith.constant 6 : index
    %c0_76 = arith.constant 0 : index
    %c0_77 = arith.constant 0 : index
    %168 = vector.load %arg17[%c6, %c0_76, %c0_77] : memref<9x2x128xf32, #tpu.memory_space<vmem>>, vector<1x2x128xf32>
    %169 = vector.shape_cast %168 : vector<1x2x128xf32> to vector<2x128xf32>
    %170 = vector.shape_cast %167 : vector<2x128xf32> to vector<1x2x128xf32>
    tpu.vector_store %arg17[%c6, %c0_76, %c0_77], %170 {strides = array<i32>} : memref<9x2x128xf32, #tpu.memory_space<vmem>>, vector<1x2x128xf32>,
    %cst_78 = arith.constant 1.000000e+00 : f32
    %171 = vector.broadcast %cst_78 : f32 to vector<2x128xf32>
    %172 = arith.subf %171, %6 : vector<2x128xf32>
    %173 = arith.mulf %43, %172 : vector<2x128xf32>
    %cst_79 = arith.constant 1.000000e+00 : f32
    %174 = vector.broadcast %cst_79 : f32 to vector<2x128xf32>
    %175 = arith.subf %174, %6 : vector<2x128xf32>
    %176 = arith.mulf %45, %175 : vector<2x128xf32>
    %177 = arith.addf %173, %176 : vector<2x128xf32>
    %cst_80 = arith.constant 1.000000e+00 : f32
    %178 = vector.broadcast %cst_80 : f32 to vector<2x128xf32>
    %179 = arith.mulf %46, %178 : vector<2x128xf32>
    %180 = arith.addf %177, %179 : vector<2x128xf32>
    %181 = arith.mulf %180, %10 : vector<2x128xf32>
    %182 = arith.addf %22, %181 : vector<2x128xf32>
    %cst_81 = arith.constant -1.000000e+00 : f32
    %183 = vector.broadcast %cst_81 : f32 to vector<2x128xf32>
    %184 = arith.mulf %32, %183 : vector<2x128xf32>
    %cst_82 = arith.constant -1.000000e+00 : f32
    %185 = vector.broadcast %cst_82 : f32 to vector<2x128xf32>
    %186 = arith.mulf %41, %185 : vector<2x128xf32>
    %187 = arith.addf %184, %186 : vector<2x128xf32>
    %188 = arith.mulf %187, %7 : vector<2x128xf32>
    %189 = arith.addf %182, %188 : vector<2x128xf32>
    %cst_83 = arith.constant 0.027777778 : f32
    %190 = vector.broadcast %cst_83 : f32 to vector<2x128xf32>
    %191 = arith.mulf %190, %189 : vector<2x128xf32>
    %c7 = arith.constant 7 : index
    %c0_84 = arith.constant 0 : index
    %c0_85 = arith.constant 0 : index
    %192 = vector.load %arg17[%c7, %c0_84, %c0_85] : memref<9x2x128xf32, #tpu.memory_space<vmem>>, vector<1x2x128xf32>
    %193 = vector.shape_cast %192 : vector<1x2x128xf32> to vector<2x128xf32>
    %194 = vector.shape_cast %191 : vector<2x128xf32> to vector<1x2x128xf32>
    tpu.vector_store %arg17[%c7, %c0_84, %c0_85], %194 {strides = array<i32>} : memref<9x2x128xf32, #tpu.memory_space<vmem>>, vector<1x2x128xf32>,
    %cst_86 = arith.constant 1.000000e+00 : f32
    %195 = vector.broadcast %cst_86 : f32 to vector<2x128xf32>
    %196 = arith.subf %195, %6 : vector<2x128xf32>
    %197 = arith.mulf %43, %196 : vector<2x128xf32>
    %cst_87 = arith.constant 1.000000e+00 : f32
    %198 = vector.broadcast %cst_87 : f32 to vector<2x128xf32>
    %199 = arith.subf %198, %6 : vector<2x128xf32>
    %200 = arith.mulf %45, %199 : vector<2x128xf32>
    %201 = arith.addf %197, %200 : vector<2x128xf32>
    %cst_88 = arith.constant -1.000000e+00 : f32
    %202 = vector.broadcast %cst_88 : f32 to vector<2x128xf32>
    %203 = arith.mulf %46, %202 : vector<2x128xf32>
    %204 = arith.addf %201, %203 : vector<2x128xf32>
    %205 = arith.mulf %204, %10 : vector<2x128xf32>
    %206 = arith.addf %22, %205 : vector<2x128xf32>
    %cst_89 = arith.constant -1.000000e+00 : f32
    %207 = vector.broadcast %cst_89 : f32 to vector<2x128xf32>
    %208 = arith.mulf %41, %207 : vector<2x128xf32>
    %209 = arith.addf %32, %208 : vector<2x128xf32>
    %210 = arith.mulf %209, %7 : vector<2x128xf32>
    %211 = arith.addf %206, %210 : vector<2x128xf32>
    %cst_90 = arith.constant 0.027777778 : f32
    %212 = vector.broadcast %cst_90 : f32 to vector<2x128xf32>
    %213 = arith.mulf %212, %211 : vector<2x128xf32>
    %c8 = arith.constant 8 : index
    %c0_91 = arith.constant 0 : index
    %c0_92 = arith.constant 0 : index
    %214 = vector.load %arg17[%c8, %c0_91, %c0_92] : memref<9x2x128xf32, #tpu.memory_space<vmem>>, vector<1x2x128xf32>
    %215 = vector.shape_cast %214 : vector<1x2x128xf32> to vector<2x128xf32>
    %216 = vector.shape_cast %213 : vector<2x128xf32> to vector<1x2x128xf32>
    tpu.vector_store %arg17[%c8, %c0_91, %c0_92], %216 {strides = array<i32>} : memref<9x2x128xf32, #tpu.memory_space<vmem>>, vector<1x2x128xf32>,
    return
  }
  func.func @transform_0(%arg0: i32) -> (i32, i32) {
    %c0_i32 = arith.constant 0 : i32
    %c0_i32_0 = arith.constant 0 : i32
    return %arg0, %c0_i32 : i32, i32
  }
  func.func @transform_1(%arg0: i32) -> (i32, i32) {
    %c0_i32 = arith.constant 0 : i32
    %c0_i32_0 = arith.constant 0 : i32
    return %arg0, %c0_i32 : i32, i32
  }
  func.func @transform_2(%arg0: i32) -> (i32, i32) {
    %c0_i32 = arith.constant 0 : i32
    %c0_i32_0 = arith.constant 0 : i32
    return %arg0, %c0_i32 : i32, i32
  }
  func.func @transform_3(%arg0: i32) -> (i32, i32) {
    %c0_i32 = arith.constant 0 : i32
    %c0_i32_0 = arith.constant 0 : i32
    return %arg0, %c0_i32 : i32, i32
  }
  func.func @transform_4(%arg0: i32) -> (i32, i32) {
    %c0_i32 = arith.constant 0 : i32
    %c0_i32_0 = arith.constant 0 : i32
    return %arg0, %c0_i32 : i32, i32
  }
  func.func @transform_5(%arg0: i32) -> (i32, i32) {
    %c0_i32 = arith.constant 0 : i32
    %c0_i32_0 = arith.constant 0 : i32
    return %arg0, %c0_i32 : i32, i32
  }
  func.func @transform_6(%arg0: i32) -> (i32, i32) {
    %c0_i32 = arith.constant 0 : i32
    %c0_i32_0 = arith.constant 0 : i32
    return %arg0, %c0_i32 : i32, i32
  }
  func.func @transform_7(%arg0: i32) -> (i32, i32) {
    %c0_i32 = arith.constant 0 : i32
    %c0_i32_0 = arith.constant 0 : i32
    return %arg0, %c0_i32 : i32, i32
  }
  func.func @transform_8(%arg0: i32) -> (i32, i32) {
    %c0_i32 = arith.constant 0 : i32
    %c0_i32_0 = arith.constant 0 : i32
    return %arg0, %c0_i32 : i32, i32
  }
  func.func @transform_9(%arg0: i32) -> (i32, i32) {
    %c0_i32 = arith.constant 0 : i32
    %c0_i32_0 = arith.constant 0 : i32
    return %arg0, %c0_i32 : i32, i32
  }
  func.func @transform_10(%arg0: i32) -> (i32, i32) {
    %c0_i32 = arith.constant 0 : i32
    %c0_i32_0 = arith.constant 0 : i32
    return %arg0, %c0_i32 : i32, i32
  }
  func.func @transform_11(%arg0: i32) -> (i32, i32) {
    %c0_i32 = arith.constant 0 : i32
    %c0_i32_0 = arith.constant 0 : i32
    return %arg0, %c0_i32 : i32, i32
  }
  func.func @transform_12(%arg0: i32) -> (i32, i32) {
    %c0_i32 = arith.constant 0 : i32
    %c0_i32_0 = arith.constant 0 : i32
    return %arg0, %c0_i32 : i32, i32
  }
  func.func @transform_13(%arg0: i32) -> (i32, i32) {
    %c0_i32 = arith.constant 0 : i32
    %c0_i32_0 = arith.constant 0 : i32
    return %arg0, %c0_i32 : i32, i32
  }
  func.func @transform_14(%arg0: i32) -> (i32, i32) {
    %c0_i32 = arith.constant 0 : i32
    %c0_i32_0 = arith.constant 0 : i32
    return %arg0, %c0_i32 : i32, i32
  }
  func.func @transform_15(%arg0: i32) -> (i32, i32) {
    %c0_i32 = arith.constant 0 : i32
    %c0_i32_0 = arith.constant 0 : i32
    return %arg0, %c0_i32 : i32, i32
  }
  func.func @transform_16(%arg0: i32) -> (i32, i32, i32) {
    %c0_i32 = arith.constant 0 : i32
    %c0_i32_0 = arith.constant 0 : i32
    %c0_i32_1 = arith.constant 0 : i32
    return %c0_i32, %arg0, %c0_i32_0 : i32, i32, i32
  }
}

</mosaic_0001>

<llo_original>
// kernel: tpu_custom_call.1
$region0: #{tpu_custom_call.1}
  #allocation0 [shape = 'u32[]', space=smem, size = 0x4, offset = 0x4, fixed_abs, tag = 'smem constant byte address 0x4 - core index']
  #allocation1 [shape = 'u32[144,128]{1,0:T(1,128)}', space=vmem, size = 0x12000, scoped, tag = 'internal scratch']
  %s0 = inlined_call_operand.hbm [shape: f32[2,128], index: 0, kind: input, shape index: {}]
  %s1 = inlined_call_operand.hbm [shape: f32[2,128], index: 1, kind: input, shape index: {}]
  %s2 = inlined_call_operand.vmem [shape: f32[2,128], index: 2, kind: input, shape index: {}]
  %s3 = inlined_call_operand.vmem [shape: f32[2,128], index: 3, kind: input, shape index: {}]
  %s4 = inlined_call_operand.vmem [shape: f32[2,128], index: 4, kind: input, shape index: {}]
  %s5 = inlined_call_operand.vmem [shape: f32[2,128], index: 5, kind: input, shape index: {}]
  %s6 = inlined_call_operand.vmem [shape: f32[2,128], index: 6, kind: input, shape index: {}]
  %s7 = inlined_call_operand.vmem [shape: f32[2,128], index: 7, kind: input, shape index: {}]
  %s8 = inlined_call_operand.vmem [shape: f32[2,128], index: 8, kind: input, shape index: {}]
  %s9 = inlined_call_operand.vmem [shape: f32[2,128], index: 9, kind: input, shape index: {}]
  %s10 = inlined_call_operand.vmem [shape: f32[2,128], index: 10, kind: input, shape index: {}]
  %s11 = inlined_call_operand.vmem [shape: f32[2,128], index: 11, kind: input, shape index: {}]
  %s12 = inlined_call_operand.hbm [shape: f32[2,128], index: 12, kind: input, shape index: {}]
  %s13 = inlined_call_operand.vmem [shape: f32[2,128], index: 13, kind: input, shape index: {}]
  %s14 = inlined_call_operand.vmem [shape: f32[2,128], index: 14, kind: input, shape index: {}]
  %s15 = inlined_call_operand.vmem [shape: f32[2,128], index: 15, kind: input, shape index: {}]
  %s16 = inlined_call_operand.hbm [shape: f32[9,2,128], index: 16, kind: output, shape index: {}]
  %s17 = sld [smem:[#allocation0]]
  $region86: #{tpu_custom_call.1} parent=0
    _
  %s19 = ssub.s32 1, %s17
  %s20 = scalar_select 0, %s19, %s17
  $region1: #{tpu_custom_call.1} parent=0
    #allocation2 [shape = 'u8[1024]{0}', space=vmem, size = 0x400, scoped, tag = 'input window, operand 0, single buffered']
    #allocation3 [shape = 's32[1]{0}', space=sflag, size = 0x4, scoped, tag = 'scoped memory for tpu_custom_call.1']
    #allocation4 [shape = 's32[1]{0}', space=sflag, size = 0x4, scoped, tag = 'scoped memory for tpu_custom_call.1']
    #allocation5 [shape = 'u8[1024]{0}', space=vmem, size = 0x400, scoped, tag = 'input window, operand 1, single buffered']
    #allocation6 [shape = 's32[1]{0}', space=sflag, size = 0x4, scoped, tag = 'scoped memory for tpu_custom_call.1']
    #allocation7 [shape = 'u8[1024]{0}', space=vmem, size = 0x400, scoped, tag = 'input window, operand 12, single buffered']
    #allocation8 [shape = 'u8[9216]{0}', space=vmem, size = 0x2400, scoped, tag = 'output window, operand 0, single buffered']
    %21 = vsyncpa [#allocation3], 0
    %22 = vsyncpa [#allocation6], 0
    %23 = vsyncpa [#allocation4], 0
    // Predicated region
    $region2: #{tpu_custom_call.1} parent=1 // pred_check
      _
    $region3: #{tpu_custom_call.1} parent=1 // pred_check_branch
      %25 = sbr.rel (0) target = $region5
    $region4: #{tpu_custom_call.1} parent=1 // pred_region
      %s27 = ssub.s32 32, 32
      %28 = vsyncadd [#allocation3], %s27
      %s30 = sshll.u32 [#allocation2], 4
      %s31 = int_to_ptr.vmem [resolvable:$true] %s30
      %33 = dma.hbm_to_vmem [thread:$0]  %s0, 32, %s31, [#allocation3]
    $region5: #{tpu_custom_call.1} parent=1 // pred_fallthru
      _
    // Predicated region
    $region6: #{tpu_custom_call.1} parent=1 // pred_check
      _
    $region7: #{tpu_custom_call.1} parent=1 // pred_check_branch
      %35 = sbr.rel (0) target = $region9
    $region8: #{tpu_custom_call.1} parent=1 // pred_region
      %s37 = ssub.s32 32, 32
      %38 = vsyncadd [#allocation6], %s37
      %s40 = sshll.u32 [#allocation5], 4
      %s41 = int_to_ptr.vmem [resolvable:$true] %s40
      %43 = dma.hbm_to_vmem [thread:$0]  %s1, 32, %s41, [#allocation6]
    $region9: #{tpu_custom_call.1} parent=1 // pred_fallthru
      _
    // Predicated region
    $region10: #{tpu_custom_call.1} parent=1 // pred_check
      _
    $region11: #{tpu_custom_call.1} parent=1 // pred_check_branch
      %45 = sbr.rel (0) target = $region13
    $region12: #{tpu_custom_call.1} parent=1 // pred_region
      _
    $region13: #{tpu_custom_call.1} parent=1 // pred_fallthru
      _
    // Predicated region
    $region14: #{tpu_custom_call.1} parent=1 // pred_check
      _
    $region15: #{tpu_custom_call.1} parent=1 // pred_check_branch
      %47 = sbr.rel (0) target = $region17
    $region16: #{tpu_custom_call.1} parent=1 // pred_region
      _
    $region17: #{tpu_custom_call.1} parent=1 // pred_fallthru
      _
    // Predicated region
    $region18: #{tpu_custom_call.1} parent=1 // pred_check
      _
    $region19: #{tpu_custom_call.1} parent=1 // pred_check_branch
      %49 = sbr.rel (0) target = $region21
    $region20: #{tpu_custom_call.1} parent=1 // pred_region
      _
    $region21: #{tpu_custom_call.1} parent=1 // pred_fallthru
      _
    // Predicated region
    $region22: #{tpu_custom_call.1} parent=1 // pred_check
      _
    $region23: #{tpu_custom_call.1} parent=1 // pred_check_branch
      %51 = sbr.rel (0) target = $region25
    $region24: #{tpu_custom_call.1} parent=1 // pred_region
      _
    $region25: #{tpu_custom_call.1} parent=1 // pred_fallthru
      _
    // Predicated region
    $region26: #{tpu_custom_call.1} parent=1 // pred_check
      _
    $region27: #{tpu_custom_call.1} parent=1 // pred_check_branch
      %53 = sbr.rel (0) target = $region29
    $region28: #{tpu_custom_call.1} parent=1 // pred_region
      _
    $region29: #{tpu_custom_call.1} parent=1 // pred_fallthru
      _
    // Predicated region
    $region30: #{tpu_custom_call.1} parent=1 // pred_check
      _
    $region31: #{tpu_custom_call.1} parent=1 // pred_check_branch
      %55 = sbr.rel (0) target = $region33
    $region32: #{tpu_custom_call.1} parent=1 // pred_region
      _
    $region33: #{tpu_custom_call.1} parent=1 // pred_fallthru
      _
    // Predicated region
    $region34: #{tpu_custom_call.1} parent=1 // pred_check
      _
    $region35: #{tpu_custom_call.1} parent=1 // pred_check_branch
      %57 = sbr.rel (0) target = $region37
    $region36: #{tpu_custom_call.1} parent=1 // pred_region
      _
    $region37: #{tpu_custom_call.1} parent=1 // pred_fallthru
      _
    // Predicated region
    $region38: #{tpu_custom_call.1} parent=1 // pred_check
      _
    $region39: #{tpu_custom_call.1} parent=1 // pred_check_branch
      %59 = sbr.rel (0) target = $region41
    $region40: #{tpu_custom_call.1} parent=1 // pred_region
      _
    $region41: #{tpu_custom_call.1} parent=1 // pred_fallthru
      _
    // Predicated region
    $region42: #{tpu_custom_call.1} parent=1 // pred_check
      _
    $region43: #{tpu_custom_call.1} parent=1 // pred_check_branch
      %61 = sbr.rel (0) target = $region45
    $region44: #{tpu_custom_call.1} parent=1 // pred_region
      _
    $region45: #{tpu_custom_call.1} parent=1 // pred_fallthru
      _
    // Predicated region
    $region46: #{tpu_custom_call.1} parent=1 // pred_check
      _
    $region47: #{tpu_custom_call.1} parent=1 // pred_check_branch
      %63 = sbr.rel (0) target = $region49
    $region48: #{tpu_custom_call.1} parent=1 // pred_region
      _
    $region49: #{tpu_custom_call.1} parent=1 // pred_fallthru
      _
    // Predicated region
    $region50: #{tpu_custom_call.1} parent=1 // pred_check
      _
    $region51: #{tpu_custom_call.1} parent=1 // pred_check_branch
      %65 = sbr.rel (0) target = $region53
    $region52: #{tpu_custom_call.1} parent=1 // pred_region
      %s67 = ssub.s32 32, 32
      %68 = vsyncadd [#allocation6], %s67
      %s70 = sshll.u32 [#allocation7], 4
      %s71 = int_to_ptr.vmem [resolvable:$true] %s70
      %73 = dma.hbm_to_vmem [thread:$0]  %s12, 32, %s71, [#allocation6]
    $region53: #{tpu_custom_call.1} parent=1 // pred_fallthru
      _
    // Predicated region
    $region54: #{tpu_custom_call.1} parent=1 // pred_check
      _
    $region55: #{tpu_custom_call.1} parent=1 // pred_check_branch
      %75 = sbr.rel (0) target = $region57
    $region56: #{tpu_custom_call.1} parent=1 // pred_region
      _
    $region57: #{tpu_custom_call.1} parent=1 // pred_fallthru
      _
    // Predicated region
    $region58: #{tpu_custom_call.1} parent=1 // pred_check
      _
    $region59: #{tpu_custom_call.1} parent=1 // pred_check_branch
      %77 = sbr.rel (0) target = $region61
    $region60: #{tpu_custom_call.1} parent=1 // pred_region
      _
    $region61: #{tpu_custom_call.1} parent=1 // pred_fallthru
      _
    // Predicated region
    $region62: #{tpu_custom_call.1} parent=1 // pred_check
      _
    $region63: #{tpu_custom_call.1} parent=1 // pred_check_branch
      %79 = sbr.rel (0) target = $region65
    $region64: #{tpu_custom_call.1} parent=1 // pred_region
      _
    $region65: #{tpu_custom_call.1} parent=1 // pred_fallthru
      _
    // Predicated region
    $region66: #{tpu_custom_call.1} parent=1 // pred_check
      _
    $region67: #{tpu_custom_call.1} parent=1 // pred_check_branch
      %81 = sbr.rel (0) target = $region69
    $region68: #{tpu_custom_call.1} parent=1 // pred_region
      %82 = dma.done [#allocation3], 32
    $region69: #{tpu_custom_call.1} parent=1 // pred_fallthru
      _
    // Predicated region
    $region70: #{tpu_custom_call.1} parent=1 // pred_check
      _
    $region71: #{tpu_custom_call.1} parent=1 // pred_check_branch
      %84 = sbr.rel (0) target = $region73
    $region72: #{tpu_custom_call.1} parent=1 // pred_region
      %85 = dma.done [#allocation6], 32
    $region73: #{tpu_custom_call.1} parent=1 // pred_fallthru
      _
    // Predicated region
    $region74: #{tpu_custom_call.1} parent=1 // pred_check
      _
    $region75: #{tpu_custom_call.1} parent=1 // pred_check_branch
      %87 = sbr.rel (0) target = $region77
    $region76: #{tpu_custom_call.1} parent=1 // pred_region
      %88 = dma.done [#allocation6], 32
    $region77: #{tpu_custom_call.1} parent=1 // pred_fallthru
      _
    %v89 = vld [vmem:[#allocation2] sm:$0x3]
    %v90 = vld [vmem:[#allocation5] sm:$0x3]
    %v91 = vld [vmem:[%s2] sm:$0x3]
    %v92 = vld [vmem:[%s3] sm:$0x3]
    %v93 = vld [vmem:[%s4] sm:$0x3]
    %v94 = vmax.f32 %v93, 1e-20
    %v95 = vrcp.pop %v94
    %v96 = vmul.f32 %v95, 0.5
    %v97 = vmul.f32 %v96, %v95
    %v98 = vld [vmem:[%s8] sm:$0x3]
    %v99 = vld [vmem:[%s5] sm:$0x3]
    %v100 = vsub.f32 %v98, %v99
    %v101 = vld [vmem:[%s9] sm:$0x3]
    %v102 = vld [vmem:[%s6] sm:$0x3]
    %v103 = vsub.f32 %v101, %v102
    %v104 = vld [vmem:[%s10] sm:$0x3]
    %v105 = vld [vmem:[%s7] sm:$0x3]
    %v106 = vsub.f32 %v104, %v105
    %v107 = vmul.f32 %v89, 2.0
    %v108 = vmul.f32 %v107, %v92
    %v109 = vmul.f32 %v108, %v94
    %v110 = vld [vmem:[%s11] sm:$0x3]
    %v111 = vmul.f32 %v90, 2.0
    %v112 = vmul.f32 %v111, %v100
    %v113 = vadd.f32 %v110, %v112
    %v114 = vmul.f32 %v91, 2.0
    %v115 = vmul.f32 %v114, %v103
    %v116 = vadd.f32 %v113, %v115
    %v117 = vld [vmem:[#allocation7] sm:$0x3]
    %v118 = vmul.f32 %v111, %v103
    %v119 = vadd.f32 %v117, %v118
    %v120 = vmul.f32 %v114, %v106
    %v121 = vadd.f32 %v119, %v120
    %v122 = vld [vmem:[%s13] sm:$0x3]
    %v123 = vsub.f32 %v122, %v109
    %v124 = vld [vmem:[%s15] sm:$0x3]
    %v125 = vsub.f32 %v124, %v109
    %v126 = vld [vmem:[%s14] sm:$0x3]
    %v127 = vsub.f32 0.0, %v94
    %v128 = vmul.f32 %v123, %v127
    %v129 = vmul.f32 %v125, %v127
    %v130 = vadd.f32 %v128, %v129
    %v131 = vmul.f32 %v130, %v97
    %v132 = vadd.f32 %v108, %v131
    %v133 = vmul.f32 %v132, 0.44444445
    %134 = vst [vmem:[#allocation8] sm:$0x3] %v133
    %v135 = vsub.f32 1.0, %v94
    %v136 = vmul.f32 %v123, %v135
    %v137 = vadd.f32 %v136, %v129
    %v138 = vmul.f32 %v137, %v97
    %v139 = vadd.f32 %v108, %v138
    %v140 = vmul.f32 %v116, %v95
    %v141 = vadd.f32 %v139, %v140
    %v142 = vmul.f32 %v141, 0.11111111
    %s143 = scalar_lea.vmem [#allocation8], 2
    %144 = vst [vmem:[%s143] sm:$0x3] %v142
    %v145 = vmul.f32 %v125, %v135
    %v146 = vadd.f32 %v128, %v145
    %v147 = vmul.f32 %v146, %v97
    %v148 = vadd.f32 %v108, %v147
    %v149 = vmul.f32 %v121, %v95
    %v150 = vadd.f32 %v148, %v149
    %v151 = vmul.f32 %v150, 0.11111111
    %s152 = scalar_lea.vmem [#allocation8], 4
    %153 = vst [vmem:[%s152] sm:$0x3] %v151
    %v154 = vmul.f32 %v116, -1.0
    %v155 = vmul.f32 %v154, %v95
    %v156 = vadd.f32 %v139, %v155
    %v157 = vmul.f32 %v156, 0.11111111
    %s158 = scalar_lea.vmem [#allocation8], 6
    %159 = vst [vmem:[%s158] sm:$0x3] %v157
    %v160 = vmul.f32 %v121, -1.0
    %v161 = vmul.f32 %v160, %v95
    %v162 = vadd.f32 %v148, %v161
    %v163 = vmul.f32 %v162, 0.11111111
    %s164 = scalar_lea.vmem [#allocation8], 8
    %165 = vst [vmem:[%s164] sm:$0x3] %v163
    %v166 = vadd.f32 %v136, %v145
    %v167 = vadd.f32 %v166, %v126
    %v168 = vmul.f32 %v167, %v97
    %v169 = vadd.f32 %v108, %v168
    %v170 = vadd.f32 %v116, %v121
    %v171 = vmul.f32 %v170, %v95
    %v172 = vadd.f32 %v169, %v171
    %v173 = vmul.f32 %v172, 0.027777778
    %s174 = scalar_lea.vmem [#allocation8], 10
    %175 = vst [vmem:[%s174] sm:$0x3] %v173
    %v176 = vmul.f32 %v126, -1.0
    %v177 = vadd.f32 %v166, %v176
    %v178 = vmul.f32 %v177, %v97
    %v179 = vadd.f32 %v108, %v178
    %v180 = vadd.f32 %v154, %v121
    %v181 = vmul.f32 %v180, %v95
    %v182 = vadd.f32 %v179, %v181
    %v183 = vmul.f32 %v182, 0.027777778
    %s184 = scalar_lea.vmem [#allocation8], 12
    %185 = vst [vmem:[%s184] sm:$0x3] %v183
    %v186 = vadd.f32 %v154, %v160
    %v187 = vmul.f32 %v186, %v95
    %v188 = vadd.f32 %v169, %v187
    %v189 = vmul.f32 %v188, 0.027777778
    %s190 = scalar_lea.vmem [#allocation8], 14
    %191 = vst [vmem:[%s190] sm:$0x3] %v189
    %v192 = vadd.f32 %v116, %v160
    %v193 = vmul.f32 %v192, %v95
    %v194 = vadd.f32 %v179, %v193
    %v195 = vmul.f32 %v194, 0.027777778
    %s196 = scalar_lea.vmem [#allocation8], 16
    %197 = vst [vmem:[%s196] sm:$0x3] %v195
    // Predicated region
    $region78: #{tpu_custom_call.1} parent=1 // pred_check
      _
    $region79: #{tpu_custom_call.1} parent=1 // pred_check_branch
      %199 = sbr.rel (0) target = $region81
    $region80: #{tpu_custom_call.1} parent=1 // pred_region
      %s201 = ssub.s32 288, 288
      %202 = vsyncadd [#allocation4], %s201
      %s203 = sshll.u32 [#allocation8], 4
      %s204 = int_to_ptr.vmem [resolvable:$true] %s203
      %209 = dma.vmem_to_hbm [thread:$0]  %s204, 288, %s16, [#allocation4], 32, 32, 2
    $region81: #{tpu_custom_call.1} parent=1 // pred_fallthru
      _
    // Predicated region
    $region82: #{tpu_custom_call.1} parent=1 // pred_check
      _
    $region83: #{tpu_custom_call.1} parent=1 // pred_check_branch
      %211 = sbr.rel (0) target = $region85
    $region84: #{tpu_custom_call.1} parent=1 // pred_region
      %212 = dma.done [#allocation4], 288
    $region85: #{tpu_custom_call.1} parent=1 // pred_fallthru
      _
    %213 = vsyncpa [#allocation3], 1
    %214 = vsyncpa [#allocation6], 1
    %215 = vsyncpa [#allocation4], 1

</llo_original>
